<compile_context>
chip_gen: v7x
topology: tpu7x:2x2x1
jax: 0.10.0
libtpu: 0.0.40
codegen_flags: <defaults>
</compile_context>

<pallas_src>
import jax
import jax.numpy as jnp
from jax.experimental import pallas as pl
from jax.experimental.pallas import tpu as pltpu


def _round_up(x, m):
    return ((x + m - 1) // m) * m


def _conv1x1_kernel(w_ref, x_ref, o_ref):
    # w_ref: (tn, Kp)  bf16 weight rows in native (Cout, Cin) layout (LHS)
    # x_ref: (Kp, tm)  bf16 pixels in (Cin, M) layout (RHS)
    # Vanilla K-on-inner MXU contraction with f32 accumulation -> no XLU
    # relayout of the streamed weight tile.
    o_ref[...] = jnp.dot(
        w_ref[...], x_ref[...], preferred_element_type=jnp.float32
    ).astype(o_ref.dtype)


def _matmul_w_x(w_packed, x_km, *, tm, tn, w_buffers):
    """(Np, Kp) @ (Kp, Mp) -> (Np, Mp) f32. Full-K single block per tile."""
    np_, kp = w_packed.shape
    kp2, mp = x_km.shape
    assert kp == kp2 and np_ % tn == 0 and mp % tm == 0

    flops = 2 * np_ * kp * mp
    bytes_accessed = (np_ * kp + kp * mp) * 2 + np_ * mp * 4

    w_spec_kwargs = {}
    if w_buffers is not None:
        # Deeper weight pipeline: mainly helps v7x, where each ~3.8 MB W tile
        # lands in ~1.2-2.4 us and the ~0.35 us per-step overhead would
        # otherwise expose the DMA. 3 x 3.8 MB buffers stay far under VMEM.
        w_spec_kwargs["pipeline_mode"] = pl.Buffered(w_buffers)

    # Grid: leading (outer) axis over Cout tiles so the megacore split lands
    # on the big axis; inner axis over M tiles (size 1 for the real shape, so
    # the weight streams exactly once and the X tile stays resident).
    w_spec = pl.BlockSpec((tn, kp), lambda i, j: (i, 0), **w_spec_kwargs)
    x_spec = pl.BlockSpec((kp, tm), lambda i, j: (0, j))
    o_spec = pl.BlockSpec((tn, tm), lambda i, j: (i, j))

    return pl.pallas_call(
        _conv1x1_kernel,
        out_shape=jax.ShapeDtypeStruct((np_, mp), jnp.float32),
        grid_spec=pltpu.PrefetchScalarGridSpec(
            num_scalar_prefetch=0,
            grid=(np_ // tn, mp // tm),
            in_specs=[w_spec, x_spec],
            out_specs=o_spec,
        ),
        compiler_params=pltpu.CompilerParams(
            dimension_semantics=("parallel", "parallel"),
            # W tile buffers (<=3 x 3.8 MB) + resident X tile + out buffers;
            # well under v7x's 64 MiB physical VMEM.
            vmem_limit_bytes=48 * 1024 * 1024,
        ),
        cost_estimate=pl.CostEstimate(
            flops=flops, transcendentals=0, bytes_accessed=bytes_accessed
        ),
    )(w_packed, x_km)


def prepack_conv1x1_weight(weight_oihw, *, tn=256, lane=128):
    """One-time weight packing: (Cout, Cin, 1, 1) f32 -> padded bf16 (Np, Kp).

    Done ONCE outside the forward path so the cast + pad of the production
    ~109 MB weight is not paid on every call.
    """
    cout, cin, kh, kw = weight_oihw.shape
    assert kh == 1 and kw == 1
    np_ = _round_up(cout, tn)
    kp = _round_up(cin, lane)
    w = weight_oihw.reshape(cout, cin).astype(jnp.bfloat16)
    w = jnp.pad(w, ((0, np_ - cout), (0, kp - cin)))
    return jax.block_until_ready(w), cout, cin


def conv2d_1x1_nchw(x_nchw, packed_weight, *, tm=64, tn=256, w_buffers=3):
    """1x1 conv, stride 1, no bias, using a pre-packed bf16 weight.

    x_nchw:        (N, Cin, H, W)
    packed_weight: result of prepack_conv1x1_weight(weight_oihw)
    returns:       (N, Cout, H, W), same dtype as x.
    """
    w_packed, cout, cin = packed_weight
    n, cin2, h, w = x_nchw.shape
    assert cin == cin2
    np_, kp = w_packed.shape
    assert np_ % tn == 0

    m = n * h * w
    if m <= tm:
        mp = tm                      # single M tile; block == full dim is exempt
    else:                            # multi-tile M must obey the 128-lane rule
        tm = _round_up(tm, 128)
        mp = _round_up(m, tm)

    # Natural (Cin, M) layout: for N=1 (the module's shape) this transpose is
    # a pure reshape of NCHW, so there is no NCHW<->NHWC relayout pass over X.
    x_km = jnp.transpose(x_nchw, (1, 0, 2, 3)).reshape(cin, m)
    x_km = jnp.pad(x_km.astype(jnp.bfloat16), ((0, kp - cin), (0, mp - m)))

    if w_buffers is not None:
        try:
            y_pad = jax.block_until_ready(
                _matmul_w_x(w_packed, x_km, tm=tm, tn=tn, w_buffers=w_buffers)
            )
        except Exception:
            # pl.Buffered / pipeline_mode unsupported on this jax version or
            # backend -> fall back to default double-buffering.
            y_pad = _matmul_w_x(w_packed, x_km, tm=tm, tn=tn, w_buffers=None)
    else:
        y_pad = _matmul_w_x(w_packed, x_km, tm=tm, tn=tn, w_buffers=None)

    y = y_pad[:cout, :m].reshape(cout, n, h, w)      # already NCHW channel order
    return jnp.transpose(y, (1, 0, 2, 3)).astype(x_nchw.dtype)


if __name__ == "__main__":
    # Small shape consistent with the module's forward (1x1 conv on NCHW).
    # Production: N=1, Cin=Cout=7392, H=W=7.  Channels scaled down but kept
    # ragged (392 % 128 != 0) and M = 1*7*7 = 49, so this exercises exactly
    # the padding paths the production shape needs.
    N, C, H, W = 1, 392, 7, 7

    key = jax.random.PRNGKey(0)
    kx, kw = jax.random.split(key)
    x = jax.random.normal(kx, (N, C, H, W), dtype=jnp.float32)
    weight = jax.random.normal(kw, (C, C, 1, 1), dtype=jnp.float32) * (1.0 / C ** 0.5)

    # Weight is cast/padded exactly once, outside the forward path.
    packed = prepack_conv1x1_weight(weight)

    y = jax.block_until_ready(conv2d_1x1_nchw(x, packed))
    assert y.shape == (N, C, H, W)
    assert y.dtype == x.dtype

    # Reference at matching precision (bf16 inputs, f32 math).
    # TODO(synk): bf16 input rounding is an intentional precision reduction vs
    # the f32 PyTorch Conv2d; accumulation stays f32 on the MXU.
    x_bf = x.astype(jnp.bfloat16).astype(jnp.float32)
    w_bf = weight[:, :, 0, 0].astype(jnp.bfloat16).astype(jnp.float32)
    y_ref = jnp.einsum("nchw,oc->nohw", x_bf, w_bf)
    assert jnp.allclose(y, y_ref, atol=2e-2, rtol=2e-2), float(
        jnp.max(jnp.abs(y - y_ref))
    )

    print("KERNEL_OK")
</pallas_src>

<mosaic_0001>
module attributes {stable_mosaic.version = 11 : i64} {
  func.func @_conv1x1_kernel(%arg0: i32, %arg1: i32, %arg2: memref<256x512xbf16, #tpu.memory_space<vmem>>, %arg3: memref<512x64xbf16, #tpu.memory_space<vmem>>, %arg4: memref<256x64xf32, #tpu.memory_space<vmem>>) attributes {dimension_semantics = [#tpu.dimension_semantics<parallel>, #tpu.dimension_semantics<parallel>], iteration_bounds = array<i64: 2, 1>, scalar_prefetch = 0 : i64, scratch_operands = 0 : i64, tpu.core_type = #tpu.core_type<tc>, window_params = [{transform_indices = @transform_0, window_bounds = array<i64: 256, 512>}, {transform_indices = @transform_1, window_bounds = array<i64: 512, 64>}, {transform_indices = @transform_2, window_bounds = array<i64: 256, 64>}]} {
    %c0 = arith.constant 0 : index
    %c0_0 = arith.constant 0 : index
    %0 = vector.load %arg2[%c0, %c0_0] : memref<256x512xbf16, #tpu.memory_space<vmem>>, vector<256x512xbf16>
    %c0_1 = arith.constant 0 : index
    %c0_2 = arith.constant 0 : index
    %1 = vector.load %arg3[%c0_1, %c0_2] : memref<512x64xbf16, #tpu.memory_space<vmem>>, vector<512x64xbf16>
    %cst = arith.constant dense<0.000000e+00> : vector<256x64xf32>
    %2 = tpu.matmul %0, %1, %cst {dimension_numbers = #tpu.dot_dimension_numbers<[1], [0], [0], [1], [0, 0, 1, 1], [], []>} : vector<256x512xbf16>, vector<512x64xbf16>, vector<256x64xf32> -> vector<256x64xf32>
    %c0_3 = arith.constant 0 : index
    %c0_4 = arith.constant 0 : index
    %3 = vector.load %arg4[%c0_3, %c0_4] : memref<256x64xf32, #tpu.memory_space<vmem>>, vector<256x64xf32>
    tpu.vector_store %arg4[%c0_3, %c0_4], %2 {strides = array<i32>} : memref<256x64xf32, #tpu.memory_space<vmem>>, vector<256x64xf32>,
    return
  }
  func.func @transform_0(%arg0: i32, %arg1: i32) -> (i32, i32) {
    %c0_i32 = arith.constant 0 : i32
    %c0_i32_0 = arith.constant 0 : i32
    return %arg0, %c0_i32 : i32, i32
  }
  func.func @transform_1(%arg0: i32, %arg1: i32) -> (i32, i32) {
    %c0_i32 = arith.constant 0 : i32
    %c0_i32_0 = arith.constant 0 : i32
    return %c0_i32, %arg1 : i32, i32
  }
  func.func @transform_2(%arg0: i32, %arg1: i32) -> (i32, i32) {
    %c0_i32 = arith.constant 0 : i32
    return %arg0, %arg1 : i32, i32
  }
}

</mosaic_0001>

<llo_original>
// kernel: tpu_custom_call.1
$region0: #{tpu_custom_call.1}
  #allocation0 [shape = 'u32[]', space=smem, size = 0x4, offset = 0x4, fixed_abs, tag = 'smem constant byte address 0x4 - core index']
  #allocation1 [shape = 'u32[144,128]{1,0:T(1,128)}', space=vmem, size = 0x12000, scoped, tag = 'internal scratch']
  %s0 = inlined_call_operand.hbm [shape: bf16[512,512], index: 0, kind: input, shape index: {}]
  %s1 = inlined_call_operand.vmem [shape: bf16[512,64], index: 1, kind: input, shape index: {}]
  %s2 = inlined_call_operand.vmem [shape: f32[512,64], index: 2, kind: output, shape index: {}]
  %s3 = sld [smem:[#allocation0]]
  $region45: #{tpu_custom_call.1} parent=0
    _
  %s5 = ssub.s32 1, %s3
  %s6 = scalar_select 0, %s5, %s3
  $region1: #{tpu_custom_call.1} parent=0
    #allocation2 [shape = 'u8[524288]{0}', space=vmem, size = 0x80000, scoped, tag = 'input window, operand 0']
    #allocation3 [shape = 's32[2]{0}', space=sflag, size = 0x8, scoped, tag = 'scoped memory for tpu_custom_call.1']
    %7 = vsyncpa [#allocation3], 0
    %s8 = scalar_lea.sflag [#allocation3], 1
    %9 = vsyncpa %s8, 0
    loop: start=0, step=1, limit=4
    $region2: #{tpu_custom_call.1} parent=1 // loop_pre_header
      _
    $region3: #{tpu_custom_call.1} parent=1 // loop_header
      %s11 = sphi 0, %s15
      %p12 = scmp.ge.s32.totalorder %s11, 4
      %s18 = sphi 0, %s30
      %s19 = sphi 0, %s26
      %s20 = sphi 0, %s18
      %s21 = sphi 0, %s19
      %s22 = sphi 0, %s20
      %s23 = sphi 0, %s21
      %s33 = sphi 0, %s35
      %s36 = sphi 0, %s33
      %s37 = sphi 0, %s36
      %s53 = sphi 0, %s37
      %s59 = sphi 0, %s61
      %s62 = sphi 0, %s59
      %s63 = sphi 0, %s62
      %s79 = sphi 0, %s63
      %s87 = sphi 0, %s89
      %s90 = sphi 0, %s87
      %s91 = sphi 0, %s90
      %s107 = sphi 0, %s91
    $region4: #{tpu_custom_call.1} parent=1 // loop_header_branch
      %14 = sbr.rel (%p12) target = $region8
    $region5: #{tpu_custom_call.1} parent=1 // loop_body
      %s16 = ssub.s32 %s11, 1
      %s17 = ssub.s32 %s11, 2
      %s24 = sadd.s32 1, %s19
      %p25 = scmp.ge.s32.totalorder %s24, 1
      %s26 = scalar_select %p25, 0, %s24
      %s27 = sadd.s32 1, %s18
      %s28 = scalar_select %p25, %s27, %s18
      %p29 = scmp.ge.s32.totalorder %s28, 2
      %s30 = scalar_select %p29, 0, %s28
      %s31 = ssub.s32 %s18, %s30
      %p32 = scmp.eq.s32.totalorder %s31, 0
      %s34 = sadd.s32 %s33, 1
      %s35 = scalar_select %p32, %s33, %s34
      %p38 = pneg %p32
      %p39 = scmp.eq.s32.totalorder %s11, 1
      %p40 = por %p38, %p39
      %p41 = scmp.ne.s32.totalorder %s33, %s36
      %p42 = scmp.eq.s32.totalorder %s11, 0
      %p43 = por %p41, %p42
      %p44 = scmp.ne.s32.totalorder %s33, %s36
      %p45 = scmp.eq.s32.totalorder %s16, 1
      %p46 = por %p44, %p45
      %p47 = scmp.ne.s32.totalorder %s36, %s37
      %p48 = scmp.eq.s32.totalorder %s16, 0
      %p49 = por %p47, %p48
      %p50 = scmp.ne.s32.totalorder %s36, %s37
      %p51 = scmp.eq.s32.totalorder %s17, 1
      %p52 = por %p50, %p51
      %p54 = scmp.ne.s32.totalorder %s37, %s53
      %p55 = scmp.eq.s32.totalorder %s17, 0
      %p56 = por %p54, %p55
      %s57 = ssub.s32 %s19, %s26
      %p58 = scmp.eq.s32.totalorder %s57, 0
      %s60 = sadd.s32 %s59, 1
      %s61 = scalar_select %p58, %s59, %s60
      %p64 = pneg %p58
      %p65 = scmp.eq.s32.totalorder %s11, 1
      %p66 = por %p64, %p65
      %p67 = scmp.ne.s32.totalorder %s59, %s62
      %p68 = scmp.eq.s32.totalorder %s11, 0
      %p69 = por %p67, %p68
      %p70 = scmp.ne.s32.totalorder %s59, %s62
      %p71 = scmp.eq.s32.totalorder %s16, 1
      %p72 = por %p70, %p71
      %p73 = scmp.ne.s32.totalorder %s62, %s63
      %p74 = scmp.eq.s32.totalorder %s16, 0
      %p75 = por %p73, %p74
      %p76 = scmp.ne.s32.totalorder %s62, %s63
      %p77 = scmp.eq.s32.totalorder %s17, 1
      %p78 = por %p76, %p77
      %p80 = scmp.ne.s32.totalorder %s63, %s79
      %p81 = scmp.eq.s32.totalorder %s17, 0
      %p82 = por %p80, %p81
      %s83 = ssub.s32 %s18, %s30
      %s84 = ssub.s32 %s19, %s26
      %s85 = sor.u32 %s83, %s84
      %p86 = scmp.eq.s32.totalorder %s85, 0
      %s88 = sadd.s32 %s87, 1
      %s89 = scalar_select %p86, %s87, %s88
      %p92 = pneg %p86
      %p93 = scmp.eq.s32.totalorder %s11, 1
      %p94 = por %p92, %p93
      %p95 = scmp.ne.s32.totalorder %s87, %s90
      %p96 = scmp.eq.s32.totalorder %s11, 0
      %p97 = por %p95, %p96
      %p98 = scmp.ne.s32.totalorder %s87, %s90
      %p99 = scmp.eq.s32.totalorder %s16, 1
      %p100 = por %p98, %p99
      %p101 = scmp.ne.s32.totalorder %s90, %s91
      %p102 = scmp.eq.s32.totalorder %s16, 0
      %p103 = por %p101, %p102
      %p104 = scmp.ne.s32.totalorder %s90, %s91
      %p105 = scmp.eq.s32.totalorder %s17, 1
      %p106 = por %p104, %p105
      %p108 = scmp.ne.s32.totalorder %s91, %s107
      %p109 = scmp.eq.s32.totalorder %s17, 0
      %p110 = por %p108, %p109
      %p111 = scmp.le.s32.totalorder 1, %s11
      %p112 = scmp.lt.s32.totalorder %s11, 3
      %p113 = pnand %p111, %p112
      %p114 = pneg %p113
      // Predicated region
      $region9: #{tpu_custom_call.1} parent=5 // pred_check
        _
      $region10: #{tpu_custom_call.1} parent=5 // pred_check_branch
        %116 = sbr.rel (%p113) target = $region12
      $region11: #{tpu_custom_call.1} parent=5 // pred_region
        %s117 = ssub.s32 %s11, 1
        // Predicated region
        $region13: #{tpu_custom_call.1} parent=11 // pred_check
          %p118 = pneg %p75
        $region14: #{tpu_custom_call.1} parent=11 // pred_check_branch
          %120 = sbr.rel (%p118) target = $region16
        $region15: #{tpu_custom_call.1} parent=11 // pred_region
          %p121 = scmp.lt.s32.totalorder %s21, 0
          %s122 = scalar_select %p121, %s21, 0
          %s123 = smul.addr %s122, 4
          %s124 = scalar_lea.vmem %s1, %s123
        $region16: #{tpu_custom_call.1} parent=11 // pred_fallthru
          _
      $region12: #{tpu_custom_call.1} parent=5 // pred_fallthru
        _
      %p125 = scmp.lt.s32.totalorder %s11, 2
      // Predicated region
      $region17: #{tpu_custom_call.1} parent=5 // pred_check
        %p126 = pneg %p125
      $region18: #{tpu_custom_call.1} parent=5 // pred_check_branch
        %128 = sbr.rel (%p126) target = $region20
      $region19: #{tpu_custom_call.1} parent=5 // pred_region
        // Predicated region
        $region21: #{tpu_custom_call.1} parent=19 // pred_check
          %p129 = pneg %p43
        $region22: #{tpu_custom_call.1} parent=19 // pred_check_branch
          %131 = sbr.rel (%p129) target = $region24
        $region23: #{tpu_custom_call.1} parent=19 // pred_region
          %s132 = sand.u32 %s33, 1
          %s133 = scalar_lea.sflag [#allocation3], %s132
          %s134 = sand.u32 %s33, 1
          %s135 = smul.addr %s134, 512
          %s136 = scalar_lea.vmem [#allocation2], %s135
          %s137 = smul.u32 32, %s18
          %s139 = ssub.s32 8192, 8192
          %140 = vsyncadd %s133, %s139
          %s141 = smul.addr %s137, 4
          %s142 = smul.addr %s141, 64
          %s143 = scalar_lea.hbm %s0, %s142
          %s144 = sshll.u32 %s136, 4
          %s145 = int_to_ptr.vmem [resolvable:$true] %s144
          %150 = dma.hbm_to_vmem [thread:$0]  %s143, 8192, %s145, %s133, 256, 256, 16
        $region24: #{tpu_custom_call.1} parent=19 // pred_fallthru
          _
      $region20: #{tpu_custom_call.1} parent=5 // pred_fallthru
        _
      %p151 = scmp.le.s32.totalorder 1, %s11
      %p152 = scmp.lt.s32.totalorder %s11, 3
      %p153 = pnand %p151, %p152
      %p154 = pneg %p153
      // Predicated region
      $region25: #{tpu_custom_call.1} parent=5 // pred_check
        _
      $region26: #{tpu_custom_call.1} parent=5 // pred_check_branch
        %156 = sbr.rel (%p153) target = $region28
      $region27: #{tpu_custom_call.1} parent=5 // pred_region
        %s157 = ssub.s32 %s11, 1
        %s158 = sand.u32 %s36, 1
        %s159 = scalar_lea.sflag [#allocation3], %s158
        %s160 = sand.u32 %s36, 1
        %s161 = smul.addr %s160, 512
        %s162 = scalar_lea.vmem [#allocation2], %s161
        // Predicated region
        $region29: #{tpu_custom_call.1} parent=27 // pred_check
          %p163 = pneg %p49
        $region30: #{tpu_custom_call.1} parent=27 // pred_check_branch
          %165 = sbr.rel (%p163) target = $region32
        $region31: #{tpu_custom_call.1} parent=27 // pred_region
          %166 = dma.done %s159, 8192
        $region32: #{tpu_custom_call.1} parent=27 // pred_fallthru
          _
        %s167 = sand.u32 %s36, 1
        %s168 = scalar_lea.sflag [#allocation3], %s167
        %s169 = sand.u32 %s36, 1
        %s170 = smul.addr %s169, 512
        %s171 = scalar_lea.vmem [#allocation2], %s170
        %p172 = pneg %p49
        %p173 = pneg %p46
        %p174 = scmp.lt.s32.totalorder %s21, 0
        %s175 = scalar_select %p174, %s21, 0
        %s176 = smul.addr %s175, 4
        %s177 = scalar_lea.vmem %s1, %s176
        %p178 = pneg %p75
        %p179 = pneg %p72
        %p180 = pneg %p103
        %p181 = pneg %p100
        %s182 = smul.u32 32, %s20
        %p183 = scmp.lt.s32.totalorder %s182, 63
        %s184 = scalar_select %p183, %s182, 63
        %p185 = scmp.lt.s32.totalorder %s21, 0
        %s186 = scalar_select %p185, %s21, 0
        %s187 = sadd.s32 %s186, %s184
        %s188 = smul.addr %s187, 8
        %s189 = scalar_lea.vmem %s2, %s188
        %s190 = smul.u32 32, %s20
        %p191 = scmp.lt.s32.totalorder %s21, 0
        %s192 = scalar_select %p191, %s21, 0
        %s193 = smul.addr %s192, 4
        %s194 = scalar_lea.vmem %s1, %s193
        %s195 = smul.u32 32, %s20
        %p196 = scmp.lt.s32.totalorder %s195, 63
        %s197 = scalar_select %p196, %s195, 63
        %p198 = scmp.lt.s32.totalorder %s21, 0
        %s199 = scalar_select %p198, %s21, 0
        %s200 = sadd.s32 %s199, %s197
        %s201 = smul.addr %s200, 8
        %s202 = scalar_lea.vmem %s2, %s201
        %s203 = smul.u32 32, %s20
        %v205 = vld [vmem:[%s162] sm:$0xff]
        %v206 = vld [vmem:[%s162 + $0x8] sm:$0xff]
        %v207 = vld [vmem:[%s162 + $0x10] sm:$0xff]
        %v208 = vld [vmem:[%s162 + $0x18] sm:$0xff]
        %v209 = vld [vmem:[%s162 + $0x20] sm:$0xff]
        %v210 = vld [vmem:[%s162 + $0x28] sm:$0xff]
        %v211 = vld [vmem:[%s162 + $0x30] sm:$0xff]
        %v212 = vld [vmem:[%s162 + $0x38] sm:$0xff]
        %v213 = vld [vmem:[%s162 + $0x40] sm:$0xff]
        %v214 = vld [vmem:[%s162 + $0x48] sm:$0xff]
        %v215 = vld [vmem:[%s162 + $0x50] sm:$0xff]
        %v216 = vld [vmem:[%s162 + $0x58] sm:$0xff]
        %v217 = vld [vmem:[%s162 + $0x60] sm:$0xff]
        %v218 = vld [vmem:[%s162 + $0x68] sm:$0xff]
        %v219 = vld [vmem:[%s162 + $0x70] sm:$0xff]
        %v220 = vld [vmem:[%s162 + $0x78] sm:$0xff]
        %v221 = vld [vmem:[%s162 + $0x80] sm:$0xff]
        %v222 = vld [vmem:[%s162 + $0x88] sm:$0xff]
        %v223 = vld [vmem:[%s162 + $0x90] sm:$0xff]
        %v224 = vld [vmem:[%s162 + $0x98] sm:$0xff]
        %v225 = vld [vmem:[%s162 + $0xa0] sm:$0xff]
        %v226 = vld [vmem:[%s162 + $0xa8] sm:$0xff]
        %v227 = vld [vmem:[%s162 + $0xb0] sm:$0xff]
        %v228 = vld [vmem:[%s162 + $0xb8] sm:$0xff]
        %v229 = vld [vmem:[%s162 + $0xc0] sm:$0xff]
        %v230 = vld [vmem:[%s162 + $0xc8] sm:$0xff]
        %v231 = vld [vmem:[%s162 + $0xd0] sm:$0xff]
        %v232 = vld [vmem:[%s162 + $0xd8] sm:$0xff]
        %v233 = vld [vmem:[%s162 + $0xe0] sm:$0xff]
        %v234 = vld [vmem:[%s162 + $0xe8] sm:$0xff]
        %v235 = vld [vmem:[%s162 + $0xf0] sm:$0xff]
        %v236 = vld [vmem:[%s162 + $0xf8] sm:$0xff]
        %v237 = vld [vmem:[%s162 + $0x100] sm:$0xff]
        %v238 = vld [vmem:[%s162 + $0x108] sm:$0xff]
        %v239 = vld [vmem:[%s162 + $0x110] sm:$0xff]
        %v240 = vld [vmem:[%s162 + $0x118] sm:$0xff]
        %v241 = vld [vmem:[%s162 + $0x120] sm:$0xff]
        %v242 = vld [vmem:[%s162 + $0x128] sm:$0xff]
        %v243 = vld [vmem:[%s162 + $0x130] sm:$0xff]
        %v244 = vld [vmem:[%s162 + $0x138] sm:$0xff]
        %v245 = vld [vmem:[%s162 + $0x140] sm:$0xff]
        %v246 = vld [vmem:[%s162 + $0x148] sm:$0xff]
        %v247 = vld [vmem:[%s162 + $0x150] sm:$0xff]
        %v248 = vld [vmem:[%s162 + $0x158] sm:$0xff]
        %v249 = vld [vmem:[%s162 + $0x160] sm:$0xff]
        %v250 = vld [vmem:[%s162 + $0x168] sm:$0xff]
        %v251 = vld [vmem:[%s162 + $0x170] sm:$0xff]
        %v252 = vld [vmem:[%s162 + $0x178] sm:$0xff]
        %v253 = vld [vmem:[%s162 + $0x180] sm:$0xff]
        %v254 = vld [vmem:[%s162 + $0x188] sm:$0xff]
        %v255 = vld [vmem:[%s162 + $0x190] sm:$0xff]
        %v256 = vld [vmem:[%s162 + $0x198] sm:$0xff]
        %v257 = vld [vmem:[%s162 + $0x1a0] sm:$0xff]
        %v258 = vld [vmem:[%s162 + $0x1a8] sm:$0xff]
        %v259 = vld [vmem:[%s162 + $0x1b0] sm:$0xff]
        %v260 = vld [vmem:[%s162 + $0x1b8] sm:$0xff]
        %v261 = vld [vmem:[%s162 + $0x1c0] sm:$0xff]
        %v262 = vld [vmem:[%s162 + $0x1c8] sm:$0xff]
        %v263 = vld [vmem:[%s162 + $0x1d0] sm:$0xff]
        %v264 = vld [vmem:[%s162 + $0x1d8] sm:$0xff]
        %v265 = vld [vmem:[%s162 + $0x1e0] sm:$0xff]
        %v266 = vld [vmem:[%s162 + $0x1e8] sm:$0xff]
        %v267 = vld [vmem:[%s162 + $0x1f0] sm:$0xff]
        %v268 = vld [vmem:[%s162 + $0x1f8] sm:$0xff]
        %v269 = vld [vmem:[%s194] sm:$0xf]
        %v270 = vld [vmem:[%s194 + $0x4] sm:$0xf]
        %v271 = vld [vmem:[%s194 + $0x8] sm:$0xf]
        %v272 = vld [vmem:[%s194 + $0xc] sm:$0xf]
        %v273 = vld [vmem:[%s194 + $0x10] sm:$0xf]
        %v274 = vld [vmem:[%s194 + $0x14] sm:$0xf]
        %v275 = vld [vmem:[%s194 + $0x18] sm:$0xf]
        %v276 = vld [vmem:[%s194 + $0x1c] sm:$0xf]
        %v277 = vld [vmem:[%s194 + $0x20] sm:$0xf]
        %v278 = vld [vmem:[%s194 + $0x24] sm:$0xf]
        %v279 = vld [vmem:[%s194 + $0x28] sm:$0xf]
        %v280 = vld [vmem:[%s194 + $0x2c] sm:$0xf]
        %v281 = vld [vmem:[%s194 + $0x30] sm:$0xf]
        %v282 = vld [vmem:[%s194 + $0x34] sm:$0xf]
        %v283 = vld [vmem:[%s194 + $0x38] sm:$0xf]
        %v284 = vld [vmem:[%s194 + $0x3c] sm:$0xf]
        %v285 = vld [vmem:[%s194 + $0x40] sm:$0xf]
        %v286 = vld [vmem:[%s194 + $0x44] sm:$0xf]
        %v287 = vld [vmem:[%s194 + $0x48] sm:$0xf]
        %v288 = vld [vmem:[%s194 + $0x4c] sm:$0xf]
        %v289 = vld [vmem:[%s194 + $0x50] sm:$0xf]
        %v290 = vld [vmem:[%s194 + $0x54] sm:$0xf]
        %v291 = vld [vmem:[%s194 + $0x58] sm:$0xf]
        %v292 = vld [vmem:[%s194 + $0x5c] sm:$0xf]
        %v293 = vld [vmem:[%s194 + $0x60] sm:$0xf]
        %v294 = vld [vmem:[%s194 + $0x64] sm:$0xf]
        %v295 = vld [vmem:[%s194 + $0x68] sm:$0xf]
        %v296 = vld [vmem:[%s194 + $0x6c] sm:$0xf]
        %v297 = vld [vmem:[%s194 + $0x70] sm:$0xf]
        %v298 = vld [vmem:[%s194 + $0x74] sm:$0xf]
        %v299 = vld [vmem:[%s194 + $0x78] sm:$0xf]
        %v300 = vld [vmem:[%s194 + $0x7c] sm:$0xf]
        %v301 = vld [vmem:[%s194 + $0x80] sm:$0xf]
        %v302 = vld [vmem:[%s194 + $0x84] sm:$0xf]
        %v303 = vld [vmem:[%s194 + $0x88] sm:$0xf]
        %v304 = vld [vmem:[%s194 + $0x8c] sm:$0xf]
        %v305 = vld [vmem:[%s194 + $0x90] sm:$0xf]
        %v306 = vld [vmem:[%s194 + $0x94] sm:$0xf]
        %v307 = vld [vmem:[%s194 + $0x98] sm:$0xf]
        %v308 = vld [vmem:[%s194 + $0x9c] sm:$0xf]
        %v309 = vld [vmem:[%s194 + $0xa0] sm:$0xf]
        %v310 = vld [vmem:[%s194 + $0xa4] sm:$0xf]
        %v311 = vld [vmem:[%s194 + $0xa8] sm:$0xf]
        %v312 = vld [vmem:[%s194 + $0xac] sm:$0xf]
        %v313 = vld [vmem:[%s194 + $0xb0] sm:$0xf]
        %v314 = vld [vmem:[%s194 + $0xb4] sm:$0xf]
        %v315 = vld [vmem:[%s194 + $0xb8] sm:$0xf]
        %v316 = vld [vmem:[%s194 + $0xbc] sm:$0xf]
        %v317 = vld [vmem:[%s194 + $0xc0] sm:$0xf]
        %v318 = vld [vmem:[%s194 + $0xc4] sm:$0xf]
        %v319 = vld [vmem:[%s194 + $0xc8] sm:$0xf]
        %v320 = vld [vmem:[%s194 + $0xcc] sm:$0xf]
        %v321 = vld [vmem:[%s194 + $0xd0] sm:$0xf]
        %v322 = vld [vmem:[%s194 + $0xd4] sm:$0xf]
        %v323 = vld [vmem:[%s194 + $0xd8] sm:$0xf]
        %v324 = vld [vmem:[%s194 + $0xdc] sm:$0xf]
        %v325 = vld [vmem:[%s194 + $0xe0] sm:$0xf]
        %v326 = vld [vmem:[%s194 + $0xe4] sm:$0xf]
        %v327 = vld [vmem:[%s194 + $0xe8] sm:$0xf]
        %v328 = vld [vmem:[%s194 + $0xec] sm:$0xf]
        %v329 = vld [vmem:[%s194 + $0xf0] sm:$0xf]
        %v330 = vld [vmem:[%s194 + $0xf4] sm:$0xf]
        %v331 = vld [vmem:[%s194 + $0xf8] sm:$0xf]
        %v332 = vld [vmem:[%s194 + $0xfc] sm:$0xf]
        %v397 = vunpack.c.l.b16 %v205
        %v398 = vunpack.c.h.b16 %v205
        %v399 = vunpack.c.l.b16 %v206
        %v400 = vunpack.c.h.b16 %v206
        %v401 = vunpack.c.l.b16 %v207
        %v402 = vunpack.c.h.b16 %v207
        %v403 = vunpack.c.l.b16 %v208
        %v404 = vunpack.c.h.b16 %v208
        %v405 = vunpack.c.l.b16 %v209
        %v406 = vunpack.c.h.b16 %v209
        %v407 = vunpack.c.l.b16 %v210
        %v408 = vunpack.c.h.b16 %v210
        %v409 = vunpack.c.l.b16 %v211
        %v410 = vunpack.c.h.b16 %v211
        %v411 = vunpack.c.l.b16 %v212
        %v412 = vunpack.c.h.b16 %v212
        %v413 = vunpack.c.l.b16 %v213
        %v414 = vunpack.c.h.b16 %v213
        %v415 = vunpack.c.l.b16 %v214
        %v416 = vunpack.c.h.b16 %v214
        %v417 = vunpack.c.l.b16 %v215
        %v418 = vunpack.c.h.b16 %v215
        %v419 = vunpack.c.l.b16 %v216
        %v420 = vunpack.c.h.b16 %v216
        %v421 = vunpack.c.l.b16 %v217
        %v422 = vunpack.c.h.b16 %v217
        %v423 = vunpack.c.l.b16 %v218
        %v424 = vunpack.c.h.b16 %v218
        %v425 = vunpack.c.l.b16 %v219
        %v426 = vunpack.c.h.b16 %v219
        %v427 = vunpack.c.l.b16 %v220
        %v428 = vunpack.c.h.b16 %v220
        %v429 = vunpack.c.l.b16 %v221
        %v430 = vunpack.c.h.b16 %v221
        %v431 = vunpack.c.l.b16 %v222
        %v432 = vunpack.c.h.b16 %v222
        %v433 = vunpack.c.l.b16 %v223
        %v434 = vunpack.c.h.b16 %v223
        %v435 = vunpack.c.l.b16 %v224
        %v436 = vunpack.c.h.b16 %v224
        %v437 = vunpack.c.l.b16 %v225
        %v438 = vunpack.c.h.b16 %v225
        %v439 = vunpack.c.l.b16 %v226
        %v440 = vunpack.c.h.b16 %v226
        %v441 = vunpack.c.l.b16 %v227
        %v442 = vunpack.c.h.b16 %v227
        %v443 = vunpack.c.l.b16 %v228
        %v444 = vunpack.c.h.b16 %v228
        %v445 = vunpack.c.l.b16 %v229
        %v446 = vunpack.c.h.b16 %v229
        %v447 = vunpack.c.l.b16 %v230
        %v448 = vunpack.c.h.b16 %v230
        %v449 = vunpack.c.l.b16 %v231
        %v450 = vunpack.c.h.b16 %v231
        %v451 = vunpack.c.l.b16 %v232
        %v452 = vunpack.c.h.b16 %v232
        %v453 = vunpack.c.l.b16 %v233
        %v454 = vunpack.c.h.b16 %v233
        %v455 = vunpack.c.l.b16 %v234
        %v456 = vunpack.c.h.b16 %v234
        %v457 = vunpack.c.l.b16 %v235
        %v458 = vunpack.c.h.b16 %v235
        %v459 = vunpack.c.l.b16 %v236
        %v460 = vunpack.c.h.b16 %v236
        %v461 = vunpack.c.l.b16 %v237
        %v462 = vunpack.c.h.b16 %v237
        %v463 = vunpack.c.l.b16 %v238
        %v464 = vunpack.c.h.b16 %v238
        %v465 = vunpack.c.l.b16 %v239
        %v466 = vunpack.c.h.b16 %v239
        %v467 = vunpack.c.l.b16 %v240
        %v468 = vunpack.c.h.b16 %v240
        %v469 = vunpack.c.l.b16 %v241
        %v470 = vunpack.c.h.b16 %v241
        %v471 = vunpack.c.l.b16 %v242
        %v472 = vunpack.c.h.b16 %v242
        %v473 = vunpack.c.l.b16 %v243
        %v474 = vunpack.c.h.b16 %v243
        %v475 = vunpack.c.l.b16 %v244
        %v476 = vunpack.c.h.b16 %v244
        %v477 = vunpack.c.l.b16 %v245
        %v478 = vunpack.c.h.b16 %v245
        %v479 = vunpack.c.l.b16 %v246
        %v480 = vunpack.c.h.b16 %v246
        %v481 = vunpack.c.l.b16 %v247
        %v482 = vunpack.c.h.b16 %v247
        %v483 = vunpack.c.l.b16 %v248
        %v484 = vunpack.c.h.b16 %v248
        %v485 = vunpack.c.l.b16 %v249
        %v486 = vunpack.c.h.b16 %v249
        %v487 = vunpack.c.l.b16 %v250
        %v488 = vunpack.c.h.b16 %v250
        %v489 = vunpack.c.l.b16 %v251
        %v490 = vunpack.c.h.b16 %v251
        %v491 = vunpack.c.l.b16 %v252
        %v492 = vunpack.c.h.b16 %v252
        %v493 = vunpack.c.l.b16 %v253
        %v494 = vunpack.c.h.b16 %v253
        %v495 = vunpack.c.l.b16 %v254
        %v496 = vunpack.c.h.b16 %v254
        %v497 = vunpack.c.l.b16 %v255
        %v498 = vunpack.c.h.b16 %v255
        %v499 = vunpack.c.l.b16 %v256
        %v500 = vunpack.c.h.b16 %v256
        %v501 = vunpack.c.l.b16 %v257
        %v502 = vunpack.c.h.b16 %v257
        %v503 = vunpack.c.l.b16 %v258
        %v504 = vunpack.c.h.b16 %v258
        %v505 = vunpack.c.l.b16 %v259
        %v506 = vunpack.c.h.b16 %v259
        %v507 = vunpack.c.l.b16 %v260
        %v508 = vunpack.c.h.b16 %v260
        %v509 = vunpack.c.l.b16 %v261
        %v510 = vunpack.c.h.b16 %v261
        %v511 = vunpack.c.l.b16 %v262
        %v512 = vunpack.c.h.b16 %v262
        %v513 = vunpack.c.l.b16 %v263
        %v514 = vunpack.c.h.b16 %v263
        %v515 = vunpack.c.l.b16 %v264
        %v516 = vunpack.c.h.b16 %v264
        %v517 = vunpack.c.l.b16 %v265
        %v518 = vunpack.c.h.b16 %v265
        %v519 = vunpack.c.l.b16 %v266
        %v520 = vunpack.c.h.b16 %v266
        %v521 = vunpack.c.l.b16 %v267
        %v522 = vunpack.c.h.b16 %v267
        %v523 = vunpack.c.l.b16 %v268
        %v524 = vunpack.c.h.b16 %v268
        %v525 = vpack.c.b16 %v401, %v397
        %v526 = vpack.c.b16 %v402, %v398
        %v527 = vpack.c.b16 %v403, %v399
        %v528 = vpack.c.b16 %v404, %v400
        %v529 = vpack.c.b16 %v409, %v405
        %v530 = vpack.c.b16 %v410, %v406
        %v531 = vpack.c.b16 %v411, %v407
        %v532 = vpack.c.b16 %v412, %v408
        %v533 = vpack.c.b16 %v417, %v413
        %v534 = vpack.c.b16 %v418, %v414
        %v535 = vpack.c.b16 %v419, %v415
        %v536 = vpack.c.b16 %v420, %v416
        %v537 = vpack.c.b16 %v425, %v421
        %v538 = vpack.c.b16 %v426, %v422
        %v539 = vpack.c.b16 %v427, %v423
        %v540 = vpack.c.b16 %v428, %v424
        %v541 = vpack.c.b16 %v433, %v429
        %v542 = vpack.c.b16 %v434, %v430
        %v543 = vpack.c.b16 %v435, %v431
        %v544 = vpack.c.b16 %v436, %v432
        %v545 = vpack.c.b16 %v441, %v437
        %v546 = vpack.c.b16 %v442, %v438
        %v547 = vpack.c.b16 %v443, %v439
        %v548 = vpack.c.b16 %v444, %v440
        %v549 = vpack.c.b16 %v449, %v445
        %v550 = vpack.c.b16 %v450, %v446
        %v551 = vpack.c.b16 %v451, %v447
        %v552 = vpack.c.b16 %v452, %v448
        %v553 = vpack.c.b16 %v457, %v453
        %v554 = vpack.c.b16 %v458, %v454
        %v555 = vpack.c.b16 %v459, %v455
        %v556 = vpack.c.b16 %v460, %v456
        %v557 = vpack.c.b16 %v465, %v461
        %v558 = vpack.c.b16 %v466, %v462
        %v559 = vpack.c.b16 %v467, %v463
        %v560 = vpack.c.b16 %v468, %v464
        %v561 = vpack.c.b16 %v473, %v469
        %v562 = vpack.c.b16 %v474, %v470
        %v563 = vpack.c.b16 %v475, %v471
        %v564 = vpack.c.b16 %v476, %v472
        %v565 = vpack.c.b16 %v481, %v477
        %v566 = vpack.c.b16 %v482, %v478
        %v567 = vpack.c.b16 %v483, %v479
        %v568 = vpack.c.b16 %v484, %v480
        %v569 = vpack.c.b16 %v489, %v485
        %v570 = vpack.c.b16 %v490, %v486
        %v571 = vpack.c.b16 %v491, %v487
        %v572 = vpack.c.b16 %v492, %v488
        %v573 = vpack.c.b16 %v497, %v493
        %v574 = vpack.c.b16 %v498, %v494
        %v575 = vpack.c.b16 %v499, %v495
        %v576 = vpack.c.b16 %v500, %v496
        %v577 = vpack.c.b16 %v505, %v501
        %v578 = vpack.c.b16 %v506, %v502
        %v579 = vpack.c.b16 %v507, %v503
        %v580 = vpack.c.b16 %v508, %v504
        %v581 = vpack.c.b16 %v513, %v509
        %v582 = vpack.c.b16 %v514, %v510
        %v583 = vpack.c.b16 %v515, %v511
        %v584 = vpack.c.b16 %v516, %v512
        %v585 = vpack.c.b16 %v521, %v517
        %v586 = vpack.c.b16 %v522, %v518
        %v587 = vpack.c.b16 %v523, %v519
        %v588 = vpack.c.b16 %v524, %v520
        %v717 = vunpack.c.l.b16 %v269
        %v718 = vunpack.c.l.b16 %v270
        %v719 = vunpack.c.l.b16 %v271
        %v720 = vunpack.c.l.b16 %v272
        %v721 = vunpack.c.l.b16 %v273
        %v722 = vunpack.c.l.b16 %v274
        %v723 = vunpack.c.l.b16 %v275
        %v724 = vunpack.c.l.b16 %v276
        %v725 = vunpack.c.l.b16 %v277
        %v726 = vunpack.c.l.b16 %v278
        %v727 = vunpack.c.l.b16 %v279
        %v728 = vunpack.c.l.b16 %v280
        %v729 = vunpack.c.l.b16 %v281
        %v730 = vunpack.c.l.b16 %v282
        %v731 = vunpack.c.l.b16 %v283
        %v732 = vunpack.c.l.b16 %v284
        %v733 = vunpack.c.l.b16 %v285
        %v734 = vunpack.c.l.b16 %v286
        %v735 = vunpack.c.l.b16 %v287
        %v736 = vunpack.c.l.b16 %v288
        %v737 = vunpack.c.l.b16 %v289
        %v738 = vunpack.c.l.b16 %v290
        %v739 = vunpack.c.l.b16 %v291
        %v740 = vunpack.c.l.b16 %v292
        %v741 = vunpack.c.l.b16 %v293
        %v742 = vunpack.c.l.b16 %v294
        %v743 = vunpack.c.l.b16 %v295
        %v744 = vunpack.c.l.b16 %v296
        %v745 = vunpack.c.l.b16 %v297
        %v746 = vunpack.c.l.b16 %v298
        %v747 = vunpack.c.l.b16 %v299
        %v748 = vunpack.c.l.b16 %v300
        %v749 = vunpack.c.l.b16 %v301
        %v750 = vunpack.c.l.b16 %v302
        %v751 = vunpack.c.l.b16 %v303
        %v752 = vunpack.c.l.b16 %v304
        %v753 = vunpack.c.l.b16 %v305
        %v754 = vunpack.c.l.b16 %v306
        %v755 = vunpack.c.l.b16 %v307
        %v756 = vunpack.c.l.b16 %v308
        %v757 = vunpack.c.l.b16 %v309
        %v758 = vunpack.c.l.b16 %v310
        %v759 = vunpack.c.l.b16 %v311
        %v760 = vunpack.c.l.b16 %v312
        %v761 = vunpack.c.l.b16 %v313
        %v762 = vunpack.c.l.b16 %v314
        %v763 = vunpack.c.l.b16 %v315
        %v764 = vunpack.c.l.b16 %v316
        %v765 = vunpack.c.l.b16 %v317
        %v766 = vunpack.c.l.b16 %v318
        %v767 = vunpack.c.l.b16 %v319
        %v768 = vunpack.c.l.b16 %v320
        %v769 = vunpack.c.l.b16 %v321
        %v770 = vunpack.c.l.b16 %v322
        %v771 = vunpack.c.l.b16 %v323
        %v772 = vunpack.c.l.b16 %v324
        %v773 = vunpack.c.l.b16 %v325
        %v774 = vunpack.c.l.b16 %v326
        %v775 = vunpack.c.l.b16 %v327
        %v776 = vunpack.c.l.b16 %v328
        %v777 = vunpack.c.l.b16 %v329
        %v778 = vunpack.c.l.b16 %v330
        %v779 = vunpack.c.l.b16 %v331
        %v780 = vunpack.c.l.b16 %v332
        %v781 = vpack.c.b16 %v718, %v717
        %v782 = vpack.c.b16 %v720, %v719
        %v783 = vpack.c.b16 %v722, %v721
        %v784 = vpack.c.b16 %v724, %v723
        %v785 = vpack.c.b16 %v726, %v725
        %v786 = vpack.c.b16 %v728, %v727
        %v787 = vpack.c.b16 %v730, %v729
        %v788 = vpack.c.b16 %v732, %v731
        %v789 = vpack.c.b16 %v734, %v733
        %v790 = vpack.c.b16 %v736, %v735
        %v791 = vpack.c.b16 %v738, %v737
        %v792 = vpack.c.b16 %v740, %v739
        %v793 = vpack.c.b16 %v742, %v741
        %v794 = vpack.c.b16 %v744, %v743
        %v795 = vpack.c.b16 %v746, %v745
        %v796 = vpack.c.b16 %v748, %v747
        %v797 = vpack.c.b16 %v750, %v749
        %v798 = vpack.c.b16 %v752, %v751
        %v799 = vpack.c.b16 %v754, %v753
        %v800 = vpack.c.b16 %v756, %v755
        %v801 = vpack.c.b16 %v758, %v757
        %v802 = vpack.c.b16 %v760, %v759
        %v803 = vpack.c.b16 %v762, %v761
        %v804 = vpack.c.b16 %v764, %v763
        %v805 = vpack.c.b16 %v766, %v765
        %v806 = vpack.c.b16 %v768, %v767
        %v807 = vpack.c.b16 %v770, %v769
        %v808 = vpack.c.b16 %v772, %v771
        %v809 = vpack.c.b16 %v774, %v773
        %v810 = vpack.c.b16 %v776, %v775
        %v811 = vpack.c.b16 %v778, %v777
        %v812 = vpack.c.b16 %v780, %v779
        %845 = vmatprep.subr.bf16.mxu0 0
        %846 = vmatpush1.bf16.msra.mxu0 %v781
        %847 = vmatprep.subr.bf16.mxu0 0
        %848 = vmatpush1.bf16.msra.mxu0 %v782
        %849 = vmatprep.subr.bf16.mxu0 0
        %850 = vmatpush1.bf16.msra.mxu0 %v783
        %851 = vmatprep.subr.bf16.mxu0 0
        %852 = vmatpush1.bf16.msra.mxu0 %v784
        %853 = vmatprep.subr.bf16.mxu0 0
        %854 = vmatpush1.bf16.msra.mxu0 %v785
        %855 = vmatprep.subr.bf16.mxu0 0
        %856 = vmatpush1.bf16.msra.mxu0 %v786
        %857 = vmatprep.subr.bf16.mxu0 0
        %858 = vmatpush1.bf16.msra.mxu0 %v787
        %859 = vmatprep.subr.bf16.mxu0 0
        %860 = vmatpush1.bf16.msra.mxu0 %v788
        %861 = vmatprep.subr.bf16.mxu0 0
        %862 = vmatpush1.bf16.msra.mxu0 %v789
        %863 = vmatprep.subr.bf16.mxu0 0
        %864 = vmatpush1.bf16.msra.mxu0 %v790
        %865 = vmatprep.subr.bf16.mxu0 0
        %866 = vmatpush1.bf16.msra.mxu0 %v791
        %867 = vmatprep.subr.bf16.mxu0 0
        %868 = vmatpush1.bf16.msra.mxu0 %v792
        %869 = vmatprep.subr.bf16.mxu0 0
        %870 = vmatpush1.bf16.msra.mxu0 %v793
        %871 = vmatprep.subr.bf16.mxu0 0
        %872 = vmatpush1.bf16.msra.mxu0 %v794
        %873 = vmatprep.subr.bf16.mxu0 0
        %874 = vmatpush1.bf16.msra.mxu0 %v795
        %875 = vmatprep.subr.bf16.mxu0 0
        %876 = vmatpush1.bf16.msra.mxu0 %v796
        %877 = vmatprep.mubr.bf16.mxu0 %v526
        %878 = vmatmul.mubr.bf16.gmra.mrb[0].mxu0 %v525
        %v879 = vpop.f32.mrb[0].mxu0
        %v880 = vadd.f32 0.0, %v879
        %v881 = vpop.f32.mrb[0].mxu0
        %v882 = vpop.f32.mrb[0].mxu0
        %v883 = vadd.f32 0.0, %v882
        %v884 = vpop.f32.mrb[0].mxu0
        %885 = vmatprep.mubr.bf16.mxu0 %v530
        %886 = vmatmul.mubr.bf16.gmra.mrb[0].mxu0 %v529
        %v887 = vpop.f32.mrb[0].mxu0
        %v888 = vadd.f32 0.0, %v887
        %v889 = vpop.f32.mrb[0].mxu0
        %v890 = vpop.f32.mrb[0].mxu0
        %v891 = vadd.f32 0.0, %v890
        %v892 = vpop.f32.mrb[0].mxu0
        %893 = vmatprep.mubr.bf16.mxu0 %v534
        %894 = vmatmul.mubr.bf16.gmra.mrb[0].mxu0 %v533
        %v895 = vpop.f32.mrb[0].mxu0
        %v896 = vadd.f32 0.0, %v895
        %v897 = vpop.f32.mrb[0].mxu0
        %v898 = vpop.f32.mrb[0].mxu0
        %v899 = vadd.f32 0.0, %v898
        %v900 = vpop.f32.mrb[0].mxu0
        %901 = vmatprep.mubr.bf16.mxu0 %v538
        %902 = vmatmul.mubr.bf16.gmra.mrb[0].mxu0 %v537
        %v903 = vpop.f32.mrb[0].mxu0
        %v904 = vadd.f32 0.0, %v903
        %v905 = vpop.f32.mrb[0].mxu0
        %v906 = vpop.f32.mrb[0].mxu0
        %v907 = vadd.f32 0.0, %v906
        %v908 = vpop.f32.mrb[0].mxu0
        %909 = vmatprep.mubr.bf16.mxu0 %v542
        %910 = vmatmul.mubr.bf16.gmra.mrb[0].mxu0 %v541
        %v911 = vpop.f32.mrb[0].mxu0
        %v912 = vadd.f32 0.0, %v911
        %v913 = vpop.f32.mrb[0].mxu0
        %v914 = vpop.f32.mrb[0].mxu0
        %v915 = vadd.f32 0.0, %v914
        %v916 = vpop.f32.mrb[0].mxu0
        %917 = vmatprep.mubr.bf16.mxu0 %v546
        %918 = vmatmul.mubr.bf16.gmra.mrb[0].mxu0 %v545
        %v919 = vpop.f32.mrb[0].mxu0
        %v920 = vadd.f32 0.0, %v919
        %v921 = vpop.f32.mrb[0].mxu0
        %v922 = vpop.f32.mrb[0].mxu0
        %v923 = vadd.f32 0.0, %v922
        %v924 = vpop.f32.mrb[0].mxu0
        %925 = vmatprep.mubr.bf16.mxu0 %v550
        %926 = vmatmul.mubr.bf16.gmra.mrb[0].mxu0 %v549
        %v927 = vpop.f32.mrb[0].mxu0
        %v928 = vadd.f32 0.0, %v927
        %v929 = vpop.f32.mrb[0].mxu0
        %v930 = vpop.f32.mrb[0].mxu0
        %v931 = vadd.f32 0.0, %v930
        %v932 = vpop.f32.mrb[0].mxu0
        %933 = vmatprep.mubr.bf16.mxu0 %v554
        %934 = vmatmul.mubr.bf16.gmra.mrb[0].mxu0 %v553
        %v935 = vpop.f32.mrb[0].mxu0
        %v936 = vadd.f32 0.0, %v935
        %v937 = vpop.f32.mrb[0].mxu0
        %v938 = vpop.f32.mrb[0].mxu0
        %v939 = vadd.f32 0.0, %v938
        %v940 = vpop.f32.mrb[0].mxu0
        %941 = vmatprep.mubr.bf16.mxu0 %v558
        %942 = vmatmul.mubr.bf16.gmra.mrb[0].mxu0 %v557
        %v943 = vpop.f32.mrb[0].mxu0
        %v944 = vadd.f32 0.0, %v943
        %v945 = vpop.f32.mrb[0].mxu0
        %v946 = vpop.f32.mrb[0].mxu0
        %v947 = vadd.f32 0.0, %v946
        %v948 = vpop.f32.mrb[0].mxu0
        %949 = vmatprep.mubr.bf16.mxu0 %v562
        %950 = vmatmul.mubr.bf16.gmra.mrb[0].mxu0 %v561
        %v951 = vpop.f32.mrb[0].mxu0
        %v952 = vadd.f32 0.0, %v951
        %v953 = vpop.f32.mrb[0].mxu0
        %v954 = vpop.f32.mrb[0].mxu0
        %v955 = vadd.f32 0.0, %v954
        %v956 = vpop.f32.mrb[0].mxu0
        %957 = vmatprep.mubr.bf16.mxu0 %v566
        %958 = vmatmul.mubr.bf16.gmra.mrb[0].mxu0 %v565
        %v959 = vpop.f32.mrb[0].mxu0
        %v960 = vadd.f32 0.0, %v959
        %v961 = vpop.f32.mrb[0].mxu0
        %v962 = vpop.f32.mrb[0].mxu0
        %v963 = vadd.f32 0.0, %v962
        %v964 = vpop.f32.mrb[0].mxu0
        %965 = vmatprep.mubr.bf16.mxu0 %v570
        %966 = vmatmul.mubr.bf16.gmra.mrb[0].mxu0 %v569
        %v967 = vpop.f32.mrb[0].mxu0
        %v968 = vadd.f32 0.0, %v967
        %v969 = vpop.f32.mrb[0].mxu0
        %v970 = vpop.f32.mrb[0].mxu0
        %v971 = vadd.f32 0.0, %v970
        %v972 = vpop.f32.mrb[0].mxu0
        %973 = vmatprep.mubr.bf16.mxu0 %v574
        %974 = vmatmul.mubr.bf16.gmra.mrb[0].mxu0 %v573
        %v975 = vpop.f32.mrb[0].mxu0
        %v976 = vadd.f32 0.0, %v975
        %v977 = vpop.f32.mrb[0].mxu0
        %v978 = vpop.f32.mrb[0].mxu0
        %v979 = vadd.f32 0.0, %v978
        %v980 = vpop.f32.mrb[0].mxu0
        %981 = vmatprep.mubr.bf16.mxu0 %v578
        %982 = vmatmul.mubr.bf16.gmra.mrb[0].mxu0 %v577
        %v983 = vpop.f32.mrb[0].mxu0
        %v984 = vadd.f32 0.0, %v983
        %v985 = vpop.f32.mrb[0].mxu0
        %v986 = vpop.f32.mrb[0].mxu0
        %v987 = vadd.f32 0.0, %v986
        %v988 = vpop.f32.mrb[0].mxu0
        %989 = vmatprep.mubr.bf16.mxu0 %v582
        %990 = vmatmul.mubr.bf16.gmra.mrb[0].mxu0 %v581
        %v991 = vpop.f32.mrb[0].mxu0
        %v992 = vadd.f32 0.0, %v991
        %v993 = vpop.f32.mrb[0].mxu0
        %v994 = vpop.f32.mrb[0].mxu0
        %v995 = vadd.f32 0.0, %v994
        %v996 = vpop.f32.mrb[0].mxu0
        %997 = vmatprep.mubr.bf16.mxu0 %v586
        %998 = vmatmul.mubr.bf16.gmra.mrb[0].mxu0 %v585
        %v999 = vpop.f32.mrb[0].mxu0
        %v1000 = vadd.f32 0.0, %v999
        %v1001 = vpop.f32.mrb[0].mxu0
        %v1002 = vpop.f32.mrb[0].mxu0
        %v1003 = vadd.f32 0.0, %v1002
        %v1004 = vpop.f32.mrb[0].mxu0
        %1005 = vdwg.mxu0
        %1006 = vmatprep.subr.bf16.mxu0 0
        %1007 = vmatpush1.bf16.msra.mxu0 %v797
        %1008 = vmatprep.subr.bf16.mxu0 0
        %1009 = vmatpush1.bf16.msra.mxu0 %v798
        %1010 = vmatprep.subr.bf16.mxu0 0
        %1011 = vmatpush1.bf16.msra.mxu0 %v799
        %1012 = vmatprep.subr.bf16.mxu0 0
        %1013 = vmatpush1.bf16.msra.mxu0 %v800
        %1014 = vmatprep.subr.bf16.mxu0 0
        %1015 = vmatpush1.bf16.msra.mxu0 %v801
        %1016 = vmatprep.subr.bf16.mxu0 0
        %1017 = vmatpush1.bf16.msra.mxu0 %v802
        %1018 = vmatprep.subr.bf16.mxu0 0
        %1019 = vmatpush1.bf16.msra.mxu0 %v803
        %1020 = vmatprep.subr.bf16.mxu0 0
        %1021 = vmatpush1.bf16.msra.mxu0 %v804
        %1022 = vmatprep.subr.bf16.mxu0 0
        %1023 = vmatpush1.bf16.msra.mxu0 %v805
        %1024 = vmatprep.subr.bf16.mxu0 0
        %1025 = vmatpush1.bf16.msra.mxu0 %v806
        %1026 = vmatprep.subr.bf16.mxu0 0
        %1027 = vmatpush1.bf16.msra.mxu0 %v807
        %1028 = vmatprep.subr.bf16.mxu0 0
        %1029 = vmatpush1.bf16.msra.mxu0 %v808
        %1030 = vmatprep.subr.bf16.mxu0 0
        %1031 = vmatpush1.bf16.msra.mxu0 %v809
        %1032 = vmatprep.subr.bf16.mxu0 0
        %1033 = vmatpush1.bf16.msra.mxu0 %v810
        %1034 = vmatprep.subr.bf16.mxu0 0
        %1035 = vmatpush1.bf16.msra.mxu0 %v811
        %1036 = vmatprep.subr.bf16.mxu0 0
        %1037 = vmatpush1.bf16.msra.mxu0 %v812
        %1038 = vmatprep.mubr.bf16.mxu0 %v528
        %1039 = vmatmul.mubr.bf16.gmra.mrb[0].mxu0 %v527
        %v1040 = vpop.f32.mrb[0].mxu0
        %v1041 = vadd.f32 %v880, %v1040
        %v1042 = vpop.f32.mrb[0].mxu0
        %v1043 = vpop.f32.mrb[0].mxu0
        %v1044 = vadd.f32 %v883, %v1043
        %v1045 = vpop.f32.mrb[0].mxu0
        %1046 = vmatprep.mubr.bf16.mxu0 %v532
        %1047 = vmatmul.mubr.bf16.gmra.mrb[0].mxu0 %v531
        %v1048 = vpop.f32.mrb[0].mxu0
        %v1049 = vadd.f32 %v888, %v1048
        %v1050 = vpop.f32.mrb[0].mxu0
        %v1051 = vpop.f32.mrb[0].mxu0
        %v1052 = vadd.f32 %v891, %v1051
        %v1053 = vpop.f32.mrb[0].mxu0
        %1054 = vmatprep.mubr.bf16.mxu0 %v536
        %1055 = vmatmul.mubr.bf16.gmra.mrb[0].mxu0 %v535
        %v1056 = vpop.f32.mrb[0].mxu0
        %v1057 = vadd.f32 %v896, %v1056
        %v1058 = vpop.f32.mrb[0].mxu0
        %v1059 = vpop.f32.mrb[0].mxu0
        %v1060 = vadd.f32 %v899, %v1059
        %v1061 = vpop.f32.mrb[0].mxu0
        %1062 = vmatprep.mubr.bf16.mxu0 %v540
        %1063 = vmatmul.mubr.bf16.gmra.mrb[0].mxu0 %v539
        %v1064 = vpop.f32.mrb[0].mxu0
        %v1065 = vadd.f32 %v904, %v1064
        %v1066 = vpop.f32.mrb[0].mxu0
        %v1067 = vpop.f32.mrb[0].mxu0
        %v1068 = vadd.f32 %v907, %v1067
        %v1069 = vpop.f32.mrb[0].mxu0
        %1070 = vmatprep.mubr.bf16.mxu0 %v544
        %1071 = vmatmul.mubr.bf16.gmra.mrb[0].mxu0 %v543
        %v1072 = vpop.f32.mrb[0].mxu0
        %v1073 = vadd.f32 %v912, %v1072
        %v1074 = vpop.f32.mrb[0].mxu0
        %v1075 = vpop.f32.mrb[0].mxu0
        %v1076 = vadd.f32 %v915, %v1075
        %v1077 = vpop.f32.mrb[0].mxu0
        %1078 = vmatprep.mubr.bf16.mxu0 %v548
        %1079 = vmatmul.mubr.bf16.gmra.mrb[0].mxu0 %v547
        %v1080 = vpop.f32.mrb[0].mxu0
        %v1081 = vadd.f32 %v920, %v1080
        %v1082 = vpop.f32.mrb[0].mxu0
        %v1083 = vpop.f32.mrb[0].mxu0
        %v1084 = vadd.f32 %v923, %v1083
        %v1085 = vpop.f32.mrb[0].mxu0
        %1086 = vmatprep.mubr.bf16.mxu0 %v552
        %1087 = vmatmul.mubr.bf16.gmra.mrb[0].mxu0 %v551
        %v1088 = vpop.f32.mrb[0].mxu0
        %v1089 = vadd.f32 %v928, %v1088
        %v1090 = vpop.f32.mrb[0].mxu0
        %v1091 = vpop.f32.mrb[0].mxu0
        %v1092 = vadd.f32 %v931, %v1091
        %v1093 = vpop.f32.mrb[0].mxu0
        %1094 = vmatprep.mubr.bf16.mxu0 %v556
        %1095 = vmatmul.mubr.bf16.gmra.mrb[0].mxu0 %v555
        %v1096 = vpop.f32.mrb[0].mxu0
        %v1097 = vadd.f32 %v936, %v1096
        %v1098 = vpop.f32.mrb[0].mxu0
        %v1099 = vpop.f32.mrb[0].mxu0
        %v1100 = vadd.f32 %v939, %v1099
        %v1101 = vpop.f32.mrb[0].mxu0
        %1102 = vmatprep.mubr.bf16.mxu0 %v560
        %1103 = vmatmul.mubr.bf16.gmra.mrb[0].mxu0 %v559
        %v1104 = vpop.f32.mrb[0].mxu0
        %v1105 = vadd.f32 %v944, %v1104
        %v1106 = vpop.f32.mrb[0].mxu0
        %v1107 = vpop.f32.mrb[0].mxu0
        %v1108 = vadd.f32 %v947, %v1107
        %v1109 = vpop.f32.mrb[0].mxu0
        %1110 = vmatprep.mubr.bf16.mxu0 %v564
        %1111 = vmatmul.mubr.bf16.gmra.mrb[0].mxu0 %v563
        %v1112 = vpop.f32.mrb[0].mxu0
        %v1113 = vadd.f32 %v952, %v1112
        %v1114 = vpop.f32.mrb[0].mxu0
        %v1115 = vpop.f32.mrb[0].mxu0
        %v1116 = vadd.f32 %v955, %v1115
        %v1117 = vpop.f32.mrb[0].mxu0
        %1118 = vmatprep.mubr.bf16.mxu0 %v568
        %1119 = vmatmul.mubr.bf16.gmra.mrb[0].mxu0 %v567
        %v1120 = vpop.f32.mrb[0].mxu0
        %v1121 = vadd.f32 %v960, %v1120
        %v1122 = vpop.f32.mrb[0].mxu0
        %v1123 = vpop.f32.mrb[0].mxu0
        %v1124 = vadd.f32 %v963, %v1123
        %v1125 = vpop.f32.mrb[0].mxu0
        %1126 = vmatprep.mubr.bf16.mxu0 %v572
        %1127 = vmatmul.mubr.bf16.gmra.mrb[0].mxu0 %v571
        %v1128 = vpop.f32.mrb[0].mxu0
        %v1129 = vadd.f32 %v968, %v1128
        %v1130 = vpop.f32.mrb[0].mxu0
        %v1131 = vpop.f32.mrb[0].mxu0
        %v1132 = vadd.f32 %v971, %v1131
        %v1133 = vpop.f32.mrb[0].mxu0
        %1134 = vmatprep.mubr.bf16.mxu0 %v576
        %1135 = vmatmul.mubr.bf16.gmra.mrb[0].mxu0 %v575
        %v1136 = vpop.f32.mrb[0].mxu0
        %v1137 = vadd.f32 %v976, %v1136
        %v1138 = vpop.f32.mrb[0].mxu0
        %v1139 = vpop.f32.mrb[0].mxu0
        %v1140 = vadd.f32 %v979, %v1139
        %v1141 = vpop.f32.mrb[0].mxu0
        %1142 = vmatprep.mubr.bf16.mxu0 %v580
        %1143 = vmatmul.mubr.bf16.gmra.mrb[0].mxu0 %v579
        %v1144 = vpop.f32.mrb[0].mxu0
        %v1145 = vadd.f32 %v984, %v1144
        %v1146 = vpop.f32.mrb[0].mxu0
        %v1147 = vpop.f32.mrb[0].mxu0
        %v1148 = vadd.f32 %v987, %v1147
        %v1149 = vpop.f32.mrb[0].mxu0
        %1150 = vmatprep.mubr.bf16.mxu0 %v584
        %1151 = vmatmul.mubr.bf16.gmra.mrb[0].mxu0 %v583
        %v1152 = vpop.f32.mrb[0].mxu0
        %v1153 = vadd.f32 %v992, %v1152
        %v1154 = vpop.f32.mrb[0].mxu0
        %v1155 = vpop.f32.mrb[0].mxu0
        %v1156 = vadd.f32 %v995, %v1155
        %v1157 = vpop.f32.mrb[0].mxu0
        %1158 = vmatprep.mubr.bf16.mxu0 %v588
        %1159 = vmatmul.mubr.bf16.gmra.mrb[0].mxu0 %v587
        %v1160 = vpop.f32.mrb[0].mxu0
        %v1161 = vadd.f32 %v1000, %v1160
        %v1162 = vpop.f32.mrb[0].mxu0
        %v1163 = vpop.f32.mrb[0].mxu0
        %v1164 = vadd.f32 %v1003, %v1163
        %v1165 = vpop.f32.mrb[0].mxu0
        %1166 = vdwg.mxu0
        %vm1167 = vcmask 523264
        %1168 = vst.msk [vmem:[%s202] sm:$0xff] %vm1167, %v1041
        %1169 = vst.msk [vmem:[%s202 + $0x8] sm:$0xff] %vm1167, %v1044
        %1170 = vst.msk [vmem:[%s202 + $0x10] sm:$0xff] %vm1167, %v1049
        %1171 = vst.msk [vmem:[%s202 + $0x18] sm:$0xff] %vm1167, %v1052
        %1172 = vst.msk [vmem:[%s202 + $0x20] sm:$0xff] %vm1167, %v1057
        %1173 = vst.msk [vmem:[%s202 + $0x28] sm:$0xff] %vm1167, %v1060
        %1174 = vst.msk [vmem:[%s202 + $0x30] sm:$0xff] %vm1167, %v1065
        %1175 = vst.msk [vmem:[%s202 + $0x38] sm:$0xff] %vm1167, %v1068
        %1176 = vst.msk [vmem:[%s202 + $0x40] sm:$0xff] %vm1167, %v1073
        %1177 = vst.msk [vmem:[%s202 + $0x48] sm:$0xff] %vm1167, %v1076
        %1178 = vst.msk [vmem:[%s202 + $0x50] sm:$0xff] %vm1167, %v1081
        %1179 = vst.msk [vmem:[%s202 + $0x58] sm:$0xff] %vm1167, %v1084
        %1180 = vst.msk [vmem:[%s202 + $0x60] sm:$0xff] %vm1167, %v1089
        %1181 = vst.msk [vmem:[%s202 + $0x68] sm:$0xff] %vm1167, %v1092
        %1182 = vst.msk [vmem:[%s202 + $0x70] sm:$0xff] %vm1167, %v1097
        %1183 = vst.msk [vmem:[%s202 + $0x78] sm:$0xff] %vm1167, %v1100
        %1184 = vst.msk [vmem:[%s202 + $0x80] sm:$0xff] %vm1167, %v1105
        %1185 = vst.msk [vmem:[%s202 + $0x88] sm:$0xff] %vm1167, %v1108
        %1186 = vst.msk [vmem:[%s202 + $0x90] sm:$0xff] %vm1167, %v1113
        %1187 = vst.msk [vmem:[%s202 + $0x98] sm:$0xff] %vm1167, %v1116
        %1188 = vst.msk [vmem:[%s202 + $0xa0] sm:$0xff] %vm1167, %v1121
        %1189 = vst.msk [vmem:[%s202 + $0xa8] sm:$0xff] %vm1167, %v1124
        %1190 = vst.msk [vmem:[%s202 + $0xb0] sm:$0xff] %vm1167, %v1129
        %1191 = vst.msk [vmem:[%s202 + $0xb8] sm:$0xff] %vm1167, %v1132
        %1192 = vst.msk [vmem:[%s202 + $0xc0] sm:$0xff] %vm1167, %v1137
        %1193 = vst.msk [vmem:[%s202 + $0xc8] sm:$0xff] %vm1167, %v1140
        %1194 = vst.msk [vmem:[%s202 + $0xd0] sm:$0xff] %vm1167, %v1145
        %1195 = vst.msk [vmem:[%s202 + $0xd8] sm:$0xff] %vm1167, %v1148
        %1196 = vst.msk [vmem:[%s202 + $0xe0] sm:$0xff] %vm1167, %v1153
        %1197 = vst.msk [vmem:[%s202 + $0xe8] sm:$0xff] %vm1167, %v1156
        %1198 = vst.msk [vmem:[%s202 + $0xf0] sm:$0xff] %vm1167, %v1161
        %1199 = vst.msk [vmem:[%s202 + $0xf8] sm:$0xff] %vm1167, %v1164
        %s1200 = smul.u32 32, %s20
        %p1201 = scmp.lt.s32.totalorder %s1200, 63
        %s1202 = scalar_select %p1201, %s1200, 63
        %p1203 = scmp.lt.s32.totalorder %s21, 0
        %s1204 = scalar_select %p1203, %s21, 0
        %s1205 = sadd.s32 %s1204, %s1202
        %s1206 = smul.addr %s1205, 8
        %s1207 = scalar_lea.vmem %s2, %s1206
        // Predicated region
        $region33: #{tpu_custom_call.1} parent=27 // pred_check
          %p1208 = pneg %p100
        $region34: #{tpu_custom_call.1} parent=27 // pred_check_branch
          %1210 = sbr.rel (%p1208) target = $region36
        $region35: #{tpu_custom_call.1} parent=27 // pred_region
          %s1211 = smul.u32 32, %s20
        $region36: #{tpu_custom_call.1} parent=27 // pred_fallthru
          _
      $region28: #{tpu_custom_call.1} parent=5 // pred_fallthru
        _
      %p1212 = scmp.le.s32.totalorder 2, %s11
      // Predicated region
      $region37: #{tpu_custom_call.1} parent=5 // pred_check
        %p1213 = pneg %p1212
      $region38: #{tpu_custom_call.1} parent=5 // pred_check_branch
        %1215 = sbr.rel (%p1213) target = $region40
      $region39: #{tpu_custom_call.1} parent=5 // pred_region
        %s1216 = ssub.s32 %s11, 2
        // Predicated region
        $region41: #{tpu_custom_call.1} parent=39 // pred_check
          %p1217 = pneg %p106
        $region42: #{tpu_custom_call.1} parent=39 // pred_check_branch
          %1219 = sbr.rel (%p1217) target = $region44
        $region43: #{tpu_custom_call.1} parent=39 // pred_region
          %s1220 = smul.u32 32, %s22
          %p1221 = scmp.lt.s32.totalorder %s1220, 63
          %s1222 = scalar_select %p1221, %s1220, 63
          %p1223 = scmp.lt.s32.totalorder %s23, 0
          %s1224 = scalar_select %p1223, %s23, 0
          %s1225 = sadd.s32 %s1224, %s1222
          %s1226 = smul.addr %s1225, 8
          %s1227 = scalar_lea.vmem %s2, %s1226
        $region44: #{tpu_custom_call.1} parent=39 // pred_fallthru
          _
      $region40: #{tpu_custom_call.1} parent=5 // pred_fallthru
        _
    $region6: #{tpu_custom_call.1} parent=1 // loop_footer
      %s15 = sadd.s32 1, %s11
    $region7: #{tpu_custom_call.1} parent=1 // loop_footer_branch
      %10 = sbr.rel target = $region3
    $region8: #{tpu_custom_call.1} parent=1 // loop_exit
      _
    %1228 = vsyncpa [#allocation3], 1
    %s1229 = scalar_lea.sflag [#allocation3], 1
    %1230 = vsyncpa %s1229, 1

</llo_original>
